<compile_context>
chip_gen: v5e
topology: v5e:2x2
jax: 0.10.0
libtpu: 0.0.40
codegen_flags: <defaults>
</compile_context>

<pallas_src>
import functools

import jax
import jax.numpy as jnp
from jax.experimental import pallas as pl
from jax.experimental.pallas import tpu as pltpu


HIDDEN = 32
PDROP = 0.5


def dropnet_kernel(x_ref, w1_ref, b1_ref, w2_ref, b2_ref, w3_ref, b3_ref,
                   bits1_ref, bits2_ref, o_ref, *, keep_threshold, scale):
    # Feature-major layout: features on sublanes, batch tile on the 128 lanes.
    thr = jnp.uint32(keep_threshold)
    scale = jnp.float32(scale)

    x = x_ref[...]                       # (in_dim, TB) f32
    w1 = w1_ref[...]                     # (hidden, in_dim)
    in_dim = w1.shape[1]

    # --- fc1: K == 2 -> rank-1 VPU FMAs (MXU tile would be >98% empty) ---
    h = b1_ref[...] + w1[:, 0:1] * x[0:1, :]          # (hidden, TB)
    for j in range(1, in_dim):                         # static unroll (in_dim=2)
        h = h + w1[:, j:j + 1] * x[j:j + 1, :]
    h = jnp.maximum(h, 0.0)
    # inverted dropout via integer threshold on raw uint32 bits
    keep1 = (bits1_ref[...] < thr).astype(jnp.float32)
    h = h * (keep1 * scale)

    # --- fc2 + ReLU + dropout: lane-dense (hidden, TB) MXU matmul ---
    h = jnp.dot(w2_ref[...], h, preferred_element_type=jnp.float32) + b2_ref[...]
    h = jnp.maximum(h, 0.0)
    keep2 = (bits2_ref[...] < thr).astype(jnp.float32)
    h = h * (keep2 * scale)

    # --- fc3 ---
    out = jnp.dot(w3_ref[...], h, preferred_element_type=jnp.float32) + b3_ref[...]
    o_ref[...] = out.astype(o_ref.dtype)


def dropnet_forward(x, params, dropout_key, *, pdrop=PDROP, batch_tile=128):
    """x: (B, 2) float32. params: (out, in) weights and (out, 1) biases."""
    assert batch_tile % 128 == 0, "keep the batch tile lane-dense"
    B, in_dim = x.shape
    hidden = params["w2"].shape[0]
    out_dim = params["w3"].shape[0]

    n_tiles = pl.cdiv(B, batch_tile)
    b_pad = n_tiles * batch_tile

    # Feature-major (batch on lanes); pad batch up to a whole number of tiles.
    xT = jnp.zeros((in_dim, b_pad), x.dtype).at[:, :B].set(x.T)

    # Dropout randomness: generated once per call with jax.random (portable —
    # works on TPU and in interpret mode), unique per element so no mask
    # repetition across batch tiles.
    k1, k2 = jax.random.split(dropout_key)
    bits1 = jax.random.bits(k1, (hidden, b_pad), dtype=jnp.uint32)
    bits2 = jax.random.bits(k2, (hidden, b_pad), dtype=jnp.uint32)

    keep_threshold = min(int(round((1.0 - pdrop) * 2.0 ** 32)), 2 ** 32 - 1)
    scale = 1.0 / (1.0 - pdrop)

    kernel = functools.partial(
        dropnet_kernel, keep_threshold=keep_threshold, scale=scale)

    def tiled(rows):          # streamed per batch tile
        return pl.BlockSpec((rows, batch_tile), lambda i: (0, i))

    def resident(shape):      # whole array, constant block index -> stays in VMEM
        return pl.BlockSpec(shape, lambda i: (0, 0))

    outT = pl.pallas_call(
        kernel,
        out_shape=jax.ShapeDtypeStruct((out_dim, b_pad), x.dtype),
        grid=(n_tiles,),
        in_specs=[
            tiled(in_dim),                    # xT
            resident((hidden, in_dim)),       # w1
            resident((hidden, 1)),            # b1
            resident((hidden, hidden)),       # w2
            resident((hidden, 1)),            # b2
            resident((out_dim, hidden)),      # w3
            resident((out_dim, 1)),           # b3
            tiled(hidden),                    # bits1
            tiled(hidden),                    # bits2
        ],
        out_specs=tiled(out_dim),
        compiler_params=pltpu.CompilerParams(
            dimension_semantics=("parallel",)),
    )(
        xT,
        params["w1"], params["b1"],
        params["w2"], params["b2"],
        params["w3"], params["b3"],
        bits1, bits2,
    )

    return outT[:, :B].T


def init_params(key, hidden=HIDDEN):
    """Deterministic init mimicking nn.Linear's U(-1/sqrt(fan_in), 1/sqrt(fan_in)).

    Weights stored (out, in) like PyTorch; biases stored (out, 1).
    """
    def linear(key, fan_in, fan_out):
        kw, kb = jax.random.split(key)
        bound = 1.0 / jnp.sqrt(float(fan_in))
        w = jax.random.uniform(kw, (fan_out, fan_in), jnp.float32, -bound, bound)
        b = jax.random.uniform(kb, (fan_out, 1), jnp.float32, -bound, bound)
        return w, b

    k1, k2, k3 = jax.random.split(key, 3)
    w1, b1 = linear(k1, 2, hidden)
    w2, b2 = linear(k2, hidden, hidden)
    w3, b3 = linear(k3, hidden, 2)
    return {"w1": w1, "b1": b1, "w2": w2, "b2": b2, "w3": w3, "b3": b3}


if __name__ == "__main__":
    key = jax.random.PRNGKey(0)
    kx, kp, kd = jax.random.split(key, 3)

    batch = 8
    x = jax.random.normal(kx, (batch, 2), dtype=jnp.float32)
    params = init_params(kp, hidden=HIDDEN)

    out = dropnet_forward(x, params, kd, pdrop=PDROP)
    out = jax.block_until_ready(out)

    assert out.shape == (batch, 2), out.shape
    assert out.dtype == jnp.float32, out.dtype
    print("KERNEL_OK")
</pallas_src>

<mosaic_0001>
module attributes {stable_mosaic.version = 11 : i64} {
  func.func @dropnet_kernel(%arg0: i32, %arg1: memref<2x128xf32, #tpu.memory_space<vmem>>, %arg2: memref<32x2xf32, #tpu.memory_space<vmem>>, %arg3: memref<32x1xf32, #tpu.memory_space<vmem>>, %arg4: memref<32x32xf32, #tpu.memory_space<vmem>>, %arg5: memref<32x1xf32, #tpu.memory_space<vmem>>, %arg6: memref<2x32xf32, #tpu.memory_space<vmem>>, %arg7: memref<2x1xf32, #tpu.memory_space<vmem>>, %arg8: memref<32x128xi32, #tpu.memory_space<vmem>>, %arg9: memref<32x128xi32, #tpu.memory_space<vmem>>, %arg10: memref<2x128xf32, #tpu.memory_space<vmem>>) attributes {dimension_semantics = [#tpu.dimension_semantics<parallel>], iteration_bounds = array<i64: 1>, scalar_prefetch = 0 : i64, scratch_operands = 0 : i64, tpu.core_type = #tpu.core_type<tc>, window_params = [{transform_indices = @transform_0, window_bounds = array<i64: 2, 128>}, {pipeline_mode = #tpu.pipeline_mode<synchronous>, transform_indices = @transform_1, window_bounds = array<i64: 32, 2>}, {pipeline_mode = #tpu.pipeline_mode<synchronous>, transform_indices = @transform_2, window_bounds = array<i64: 32, 1>}, {pipeline_mode = #tpu.pipeline_mode<synchronous>, transform_indices = @transform_3, window_bounds = array<i64: 32, 32>}, {pipeline_mode = #tpu.pipeline_mode<synchronous>, transform_indices = @transform_4, window_bounds = array<i64: 32, 1>}, {pipeline_mode = #tpu.pipeline_mode<synchronous>, transform_indices = @transform_5, window_bounds = array<i64: 2, 32>}, {pipeline_mode = #tpu.pipeline_mode<synchronous>, transform_indices = @transform_6, window_bounds = array<i64: 2, 1>}, {transform_indices = @transform_7, window_bounds = array<i64: 32, 128>}, {transform_indices = @transform_8, window_bounds = array<i64: 32, 128>}, {transform_indices = @transform_9, window_bounds = array<i64: 2, 128>}]} {
    %c0 = arith.constant 0 : index
    %c0_0 = arith.constant 0 : index
    %0 = vector.load %arg1[%c0, %c0_0] : memref<2x128xf32, #tpu.memory_space<vmem>>, vector<2x128xf32>
    %c0_1 = arith.constant 0 : index
    %c0_2 = arith.constant 0 : index
    %1 = vector.load %arg2[%c0_1, %c0_2] : memref<32x2xf32, #tpu.memory_space<vmem>>, vector<32x2xf32>
    %c0_3 = arith.constant 0 : index
    %c0_4 = arith.constant 0 : index
    %2 = vector.load %arg3[%c0_3, %c0_4] : memref<32x1xf32, #tpu.memory_space<vmem>>, vector<32x1xf32>
    %3 = vector.extract_strided_slice %1 {offsets = [0, 0], sizes = [32, 1], strides = [1, 1]} : vector<32x2xf32> to vector<32x1xf32>
    %4 = vector.extract_strided_slice %0 {offsets = [0, 0], sizes = [1, 128], strides = [1, 1]} : vector<2x128xf32> to vector<1x128xf32>
    %5 = vector.broadcast %3 : vector<32x1xf32> to vector<32x128xf32>
    %6 = vector.broadcast %4 : vector<1x128xf32> to vector<32x128xf32>
    %7 = arith.mulf %5, %6 : vector<32x128xf32>
    %8 = vector.broadcast %2 : vector<32x1xf32> to vector<32x128xf32>
    %9 = arith.addf %8, %7 : vector<32x128xf32>
    %10 = vector.extract_strided_slice %1 {offsets = [0, 1], sizes = [32, 1], strides = [1, 1]} : vector<32x2xf32> to vector<32x1xf32>
    %11 = vector.extract_strided_slice %0 {offsets = [1, 0], sizes = [1, 128], strides = [1, 1]} : vector<2x128xf32> to vector<1x128xf32>
    %12 = vector.broadcast %10 : vector<32x1xf32> to vector<32x128xf32>
    %13 = vector.broadcast %11 : vector<1x128xf32> to vector<32x128xf32>
    %14 = arith.mulf %12, %13 : vector<32x128xf32>
    %15 = arith.addf %9, %14 : vector<32x128xf32>
    %cst = arith.constant 0.000000e+00 : f32
    %16 = vector.broadcast %cst : f32 to vector<32x128xf32>
    %17 = arith.maximumf %15, %16 : vector<32x128xf32>
    %c0_5 = arith.constant 0 : index
    %c0_6 = arith.constant 0 : index
    %18 = vector.load %arg8[%c0_5, %c0_6] : memref<32x128xi32, #tpu.memory_space<vmem>>, vector<32x128xi32>
    %c-2147483648_i32 = arith.constant -2147483648 : i32
    %19 = vector.broadcast %c-2147483648_i32 : i32 to vector<32x128xi32>
    %20 = arith.cmpi ult, %18, %19 : vector<32x128xi32>
    %21 = arith.extui %20 : vector<32x128xi1> to vector<32x128xi32>
    %22 = arith.sitofp %21 : vector<32x128xi32> to vector<32x128xf32>
    %cst_7 = arith.constant 2.000000e+00 : f32
    %23 = vector.broadcast %cst_7 : f32 to vector<32x128xf32>
    %24 = arith.mulf %22, %23 : vector<32x128xf32>
    %25 = arith.mulf %17, %24 : vector<32x128xf32>
    %c0_8 = arith.constant 0 : index
    %c0_9 = arith.constant 0 : index
    %26 = vector.load %arg4[%c0_8, %c0_9] : memref<32x32xf32, #tpu.memory_space<vmem>>, vector<32x32xf32>
    %cst_10 = arith.constant dense<0.000000e+00> : vector<32x128xf32>
    %27 = tpu.matmul %26, %25, %cst_10 {dimension_numbers = #tpu.dot_dimension_numbers<[1], [0], [0], [1], [0, 0, 1, 1], [], []>} : vector<32x32xf32>, vector<32x128xf32>, vector<32x128xf32> -> vector<32x128xf32>
    %c0_11 = arith.constant 0 : index
    %c0_12 = arith.constant 0 : index
    %28 = vector.load %arg5[%c0_11, %c0_12] : memref<32x1xf32, #tpu.memory_space<vmem>>, vector<32x1xf32>
    %29 = vector.broadcast %28 : vector<32x1xf32> to vector<32x128xf32>
    %30 = arith.addf %27, %29 : vector<32x128xf32>
    %cst_13 = arith.constant 0.000000e+00 : f32
    %31 = vector.broadcast %cst_13 : f32 to vector<32x128xf32>
    %32 = arith.maximumf %30, %31 : vector<32x128xf32>
    %c0_14 = arith.constant 0 : index
    %c0_15 = arith.constant 0 : index
    %33 = vector.load %arg9[%c0_14, %c0_15] : memref<32x128xi32, #tpu.memory_space<vmem>>, vector<32x128xi32>
    %c-2147483648_i32_16 = arith.constant -2147483648 : i32
    %34 = vector.broadcast %c-2147483648_i32_16 : i32 to vector<32x128xi32>
    %35 = arith.cmpi ult, %33, %34 : vector<32x128xi32>
    %36 = arith.extui %35 : vector<32x128xi1> to vector<32x128xi32>
    %37 = arith.sitofp %36 : vector<32x128xi32> to vector<32x128xf32>
    %cst_17 = arith.constant 2.000000e+00 : f32
    %38 = vector.broadcast %cst_17 : f32 to vector<32x128xf32>
    %39 = arith.mulf %37, %38 : vector<32x128xf32>
    %40 = arith.mulf %32, %39 : vector<32x128xf32>
    %c0_18 = arith.constant 0 : index
    %c0_19 = arith.constant 0 : index
    %41 = vector.load %arg6[%c0_18, %c0_19] : memref<2x32xf32, #tpu.memory_space<vmem>>, vector<2x32xf32>
    %cst_20 = arith.constant dense<0.000000e+00> : vector<2x128xf32>
    %42 = tpu.matmul %41, %40, %cst_20 {dimension_numbers = #tpu.dot_dimension_numbers<[1], [0], [0], [1], [0, 0, 1, 1], [], []>} : vector<2x32xf32>, vector<32x128xf32>, vector<2x128xf32> -> vector<2x128xf32>
    %c0_21 = arith.constant 0 : index
    %c0_22 = arith.constant 0 : index
    %43 = vector.load %arg7[%c0_21, %c0_22] : memref<2x1xf32, #tpu.memory_space<vmem>>, vector<2x1xf32>
    %44 = vector.broadcast %43 : vector<2x1xf32> to vector<2x128xf32>
    %45 = arith.addf %42, %44 : vector<2x128xf32>
    %c0_23 = arith.constant 0 : index
    %c0_24 = arith.constant 0 : index
    %46 = vector.load %arg10[%c0_23, %c0_24] : memref<2x128xf32, #tpu.memory_space<vmem>>, vector<2x128xf32>
    tpu.vector_store %arg10[%c0_23, %c0_24], %45 {strides = array<i32>} : memref<2x128xf32, #tpu.memory_space<vmem>>, vector<2x128xf32>,
    return
  }
  func.func @transform_0(%arg0: i32) -> (i32, i32) {
    %c0_i32 = arith.constant 0 : i32
    %c0_i32_0 = arith.constant 0 : i32
    return %c0_i32, %arg0 : i32, i32
  }
  func.func @transform_1(%arg0: i32) -> (i32, i32) {
    %c0_i32 = arith.constant 0 : i32
    %c0_i32_0 = arith.constant 0 : i32
    %c0_i32_1 = arith.constant 0 : i32
    return %c0_i32, %c0_i32_0 : i32, i32
  }
  func.func @transform_2(%arg0: i32) -> (i32, i32) {
    %c0_i32 = arith.constant 0 : i32
    %c0_i32_0 = arith.constant 0 : i32
    %c0_i32_1 = arith.constant 0 : i32
    return %c0_i32, %c0_i32_0 : i32, i32
  }
  func.func @transform_3(%arg0: i32) -> (i32, i32) {
    %c0_i32 = arith.constant 0 : i32
    %c0_i32_0 = arith.constant 0 : i32
    %c0_i32_1 = arith.constant 0 : i32
    return %c0_i32, %c0_i32_0 : i32, i32
  }
  func.func @transform_4(%arg0: i32) -> (i32, i32) {
    %c0_i32 = arith.constant 0 : i32
    %c0_i32_0 = arith.constant 0 : i32
    %c0_i32_1 = arith.constant 0 : i32
    return %c0_i32, %c0_i32_0 : i32, i32
  }
  func.func @transform_5(%arg0: i32) -> (i32, i32) {
    %c0_i32 = arith.constant 0 : i32
    %c0_i32_0 = arith.constant 0 : i32
    %c0_i32_1 = arith.constant 0 : i32
    return %c0_i32, %c0_i32_0 : i32, i32
  }
  func.func @transform_6(%arg0: i32) -> (i32, i32) {
    %c0_i32 = arith.constant 0 : i32
    %c0_i32_0 = arith.constant 0 : i32
    %c0_i32_1 = arith.constant 0 : i32
    return %c0_i32, %c0_i32_0 : i32, i32
  }
  func.func @transform_7(%arg0: i32) -> (i32, i32) {
    %c0_i32 = arith.constant 0 : i32
    %c0_i32_0 = arith.constant 0 : i32
    return %c0_i32, %arg0 : i32, i32
  }
  func.func @transform_8(%arg0: i32) -> (i32, i32) {
    %c0_i32 = arith.constant 0 : i32
    %c0_i32_0 = arith.constant 0 : i32
    return %c0_i32, %arg0 : i32, i32
  }
  func.func @transform_9(%arg0: i32) -> (i32, i32) {
    %c0_i32 = arith.constant 0 : i32
    %c0_i32_0 = arith.constant 0 : i32
    return %c0_i32, %arg0 : i32, i32
  }
}

</mosaic_0001>

<llo_original>
// kernel: tpu_custom_call.1
$region0: #{tpu_custom_call.1}
  #allocation0 [shape = 'u32[]', space=smem, size = 0x4, offset = 0x4, fixed_abs, tag = 'smem constant byte address 0x4 - core index']
  #allocation1 [shape = 'u32[72,128]{1,0:T(1,128)}', space=vmem, size = 0x9000, scoped, tag = 'internal scratch']
  %s0 = inlined_call_operand.vmem [shape: f32[2,128], index: 0, kind: input, shape index: {}]
  %s1 = inlined_call_operand.vmem [shape: f32[32,2], index: 1, kind: input, shape index: {}]
  %s2 = inlined_call_operand.vmem [shape: f32[32,1], index: 2, kind: input, shape index: {}]
  %s3 = inlined_call_operand.vmem [shape: f32[32,32], index: 3, kind: input, shape index: {}]
  %s4 = inlined_call_operand.vmem [shape: f32[32,1], index: 4, kind: input, shape index: {}]
  %s5 = inlined_call_operand.vmem [shape: f32[2,32], index: 5, kind: input, shape index: {}]
  %s6 = inlined_call_operand.vmem [shape: f32[2,1], index: 6, kind: input, shape index: {}]
  %s7 = inlined_call_operand.vmem [shape: u32[32,128], index: 7, kind: input, shape index: {}]
  %s8 = inlined_call_operand.vmem [shape: u32[32,128], index: 8, kind: input, shape index: {}]
  %s9 = inlined_call_operand.hbm [shape: f32[2,128], index: 9, kind: output, shape index: {}]
  %s10 = sld [smem:[#allocation0]]
  $region46: #{tpu_custom_call.1} parent=0
    _
  %s12 = ssub.s32 1, %s10
  %s13 = scalar_select 0, %s12, %s10
  $region1: #{tpu_custom_call.1} parent=0
    #allocation2 [shape = 'u8[1024]{0}', space=vmem, size = 0x400, scoped, tag = 'output window, operand 0, single buffered']
    #allocation3 [shape = 's32[1]{0}', space=sflag, size = 0x4, scoped, tag = 'scoped memory for tpu_custom_call.1']
    %14 = vsyncpa [#allocation3], 0
    // Predicated region
    $region2: #{tpu_custom_call.1} parent=1 // pred_check
      _
    $region3: #{tpu_custom_call.1} parent=1 // pred_check_branch
      %16 = sbr.rel (0) target = $region5
    $region4: #{tpu_custom_call.1} parent=1 // pred_region
      _
    $region5: #{tpu_custom_call.1} parent=1 // pred_fallthru
      _
    // Predicated region
    $region6: #{tpu_custom_call.1} parent=1 // pred_check
      _
    $region7: #{tpu_custom_call.1} parent=1 // pred_check_branch
      %18 = sbr.rel (0) target = $region9
    $region8: #{tpu_custom_call.1} parent=1 // pred_region
      _
    $region9: #{tpu_custom_call.1} parent=1 // pred_fallthru
      _
    // Predicated region
    $region10: #{tpu_custom_call.1} parent=1 // pred_check
      _
    $region11: #{tpu_custom_call.1} parent=1 // pred_check_branch
      %20 = sbr.rel (0) target = $region13
    $region12: #{tpu_custom_call.1} parent=1 // pred_region
      _
    $region13: #{tpu_custom_call.1} parent=1 // pred_fallthru
      _
    // Predicated region
    $region14: #{tpu_custom_call.1} parent=1 // pred_check
      _
    $region15: #{tpu_custom_call.1} parent=1 // pred_check_branch
      %22 = sbr.rel (0) target = $region17
    $region16: #{tpu_custom_call.1} parent=1 // pred_region
      _
    $region17: #{tpu_custom_call.1} parent=1 // pred_fallthru
      _
    // Predicated region
    $region18: #{tpu_custom_call.1} parent=1 // pred_check
      _
    $region19: #{tpu_custom_call.1} parent=1 // pred_check_branch
      %24 = sbr.rel (0) target = $region21
    $region20: #{tpu_custom_call.1} parent=1 // pred_region
      _
    $region21: #{tpu_custom_call.1} parent=1 // pred_fallthru
      _
    // Predicated region
    $region22: #{tpu_custom_call.1} parent=1 // pred_check
      _
    $region23: #{tpu_custom_call.1} parent=1 // pred_check_branch
      %26 = sbr.rel (0) target = $region25
    $region24: #{tpu_custom_call.1} parent=1 // pred_region
      _
    $region25: #{tpu_custom_call.1} parent=1 // pred_fallthru
      _
    // Predicated region
    $region26: #{tpu_custom_call.1} parent=1 // pred_check
      _
    $region27: #{tpu_custom_call.1} parent=1 // pred_check_branch
      %28 = sbr.rel (0) target = $region29
    $region28: #{tpu_custom_call.1} parent=1 // pred_region
      _
    $region29: #{tpu_custom_call.1} parent=1 // pred_fallthru
      _
    // Predicated region
    $region30: #{tpu_custom_call.1} parent=1 // pred_check
      _
    $region31: #{tpu_custom_call.1} parent=1 // pred_check_branch
      %30 = sbr.rel (0) target = $region33
    $region32: #{tpu_custom_call.1} parent=1 // pred_region
      _
    $region33: #{tpu_custom_call.1} parent=1 // pred_fallthru
      _
    // Predicated region
    $region34: #{tpu_custom_call.1} parent=1 // pred_check
      _
    $region35: #{tpu_custom_call.1} parent=1 // pred_check_branch
      %32 = sbr.rel (0) target = $region37
    $region36: #{tpu_custom_call.1} parent=1 // pred_region
      _
    $region37: #{tpu_custom_call.1} parent=1 // pred_fallthru
      _
    %v33 = vld [vmem:[%s0] sm:$0x3]
    %v34 = vld [vmem:[%s1] sm:$0xff]
    %v35 = vld [vmem:[%s1 + $0x8] sm:$0xff]
    %v36 = vld [vmem:[%s1 + $0x10] sm:$0xff]
    %v37 = vld [vmem:[%s1 + $0x18] sm:$0xff]
    %v38 = vld [vmem:[%s2] sm:$0xff]
    %v39 = vld [vmem:[%s2 + $0x8] sm:$0xff]
    %v40 = vld [vmem:[%s2 + $0x10] sm:$0xff]
    %v41 = vld [vmem:[%s2 + $0x18] sm:$0xff]
    %43 = vset.pattern.permute.xlu0 0
    %44 = vperm.xlu0 %43, %v34
    %v45 = vpop.permute.xlu0 %44
    %48 = vset.pattern.permute.xlu0 0
    %49 = vperm.xlu0 %48, %v35
    %v50 = vpop.permute.xlu0 %49
    %53 = vset.pattern.permute.xlu0 0
    %54 = vperm.xlu0 %53, %v36
    %v55 = vpop.permute.xlu0 %54
    %58 = vset.pattern.permute.xlu0 0
    %59 = vperm.xlu0 %58, %v37
    %v60 = vpop.permute.xlu0 %59
    %v62 = vperm.slane %v33, 0
    %v63 = vmul.f32 %v45, %v62
    %v64 = vmul.f32 %v50, %v62
    %v65 = vmul.f32 %v55, %v62
    %v66 = vmul.f32 %v60, %v62
    %68 = vset.pattern.permute.xlu0 0
    %69 = vperm.xlu0 %68, %v38
    %v70 = vpop.permute.xlu0 %69
    %73 = vset.pattern.permute.xlu0 0
    %74 = vperm.xlu0 %73, %v39
    %v75 = vpop.permute.xlu0 %74
    %78 = vset.pattern.permute.xlu0 0
    %79 = vperm.xlu0 %78, %v40
    %v80 = vpop.permute.xlu0 %79
    %83 = vset.pattern.permute.xlu0 0
    %84 = vperm.xlu0 %83, %v41
    %v85 = vpop.permute.xlu0 %84
    %v87 = vadd.f32 %v70, %v63
    %v88 = vadd.f32 %v75, %v64
    %v89 = vadd.f32 %v80, %v65
    %v90 = vadd.f32 %v85, %v66
    %91 = vset.pattern.permute.xlu0 1
    %92 = vperm.xlu0 %91, %v34
    %v93 = vpop.permute.xlu0 %92
    %95 = vset.pattern.permute.xlu0 1
    %96 = vperm.xlu0 %95, %v35
    %v97 = vpop.permute.xlu0 %96
    %99 = vset.pattern.permute.xlu0 1
    %100 = vperm.xlu0 %99, %v36
    %v101 = vpop.permute.xlu0 %100
    %103 = vset.pattern.permute.xlu0 1
    %104 = vperm.xlu0 %103, %v37
    %v105 = vpop.permute.xlu0 %104
    %v107 = vperm.slane %v33, 1
    %v108 = vmul.f32 %v93, %v107
    %v109 = vmul.f32 %v97, %v107
    %v110 = vmul.f32 %v101, %v107
    %v111 = vmul.f32 %v105, %v107
    %v112 = vadd.f32 %v87, %v108
    %v113 = vadd.f32 %v88, %v109
    %v114 = vadd.f32 %v89, %v110
    %v115 = vadd.f32 %v90, %v111
    %v116 = vmax.f32 %v112, 0.0
    %v117 = vmax.f32 %v113, 0.0
    %v118 = vmax.f32 %v114, 0.0
    %v119 = vmax.f32 %v115, 0.0
    %v120 = vld [vmem:[%s7] sm:$0xff]
    %v121 = vld [vmem:[%s7 + $0x8] sm:$0xff]
    %v122 = vld [vmem:[%s7 + $0x10] sm:$0xff]
    %v123 = vld [vmem:[%s7 + $0x18] sm:$0xff]
    %v124 = vadd.s32 %v120, 2147483648
    %vm126 = vcmp.lt.s32.totalorder %v124, 0
    %v127 = vadd.s32 %v121, 2147483648
    %vm129 = vcmp.lt.s32.totalorder %v127, 0
    %v130 = vadd.s32 %v122, 2147483648
    %vm132 = vcmp.lt.s32.totalorder %v130, 0
    %v133 = vadd.s32 %v123, 2147483648
    %vm135 = vcmp.lt.s32.totalorder %v133, 0
    %v136 = vsel %vm126, 1, 0
    %v137 = vsel %vm129, 1, 0
    %v138 = vsel %vm132, 1, 0
    %v139 = vsel %vm135, 1, 0
    %v140 = vcvt.s32.f32 %v136
    %v141 = vcvt.s32.f32 %v137
    %v142 = vcvt.s32.f32 %v138
    %v143 = vcvt.s32.f32 %v139
    %v144 = vmul.f32 %v140, 2.0
    %v145 = vmul.f32 %v141, 2.0
    %v146 = vmul.f32 %v142, 2.0
    %v147 = vmul.f32 %v143, 2.0
    %v148 = vmul.f32 %v116, %v144
    %v149 = vmul.f32 %v117, %v145
    %v150 = vmul.f32 %v118, %v146
    %v151 = vmul.f32 %v119, %v147
    %v152 = vld [vmem:[%s3] sm:$0xff]
    %v153 = vld [vmem:[%s3 + $0x8] sm:$0xff]
    %v154 = vld [vmem:[%s3 + $0x10] sm:$0xff]
    %v155 = vld [vmem:[%s3 + $0x18] sm:$0xff]
    %v156 = vld [vmem:[%s4] sm:$0xff]
    %v157 = vld [vmem:[%s4 + $0x8] sm:$0xff]
    %v158 = vld [vmem:[%s4 + $0x10] sm:$0xff]
    %v159 = vld [vmem:[%s4 + $0x18] sm:$0xff]
    %161 = vset.pattern.permute.xlu0 0
    %162 = vperm.xlu0 %161, %v156
    %v163 = vpop.permute.xlu0 %162
    %166 = vset.pattern.permute.xlu0 0
    %167 = vperm.xlu0 %166, %v157
    %v168 = vpop.permute.xlu0 %167
    %171 = vset.pattern.permute.xlu0 0
    %172 = vperm.xlu0 %171, %v158
    %v173 = vpop.permute.xlu0 %172
    %176 = vset.pattern.permute.xlu0 0
    %177 = vperm.xlu0 %176, %v159
    %v178 = vpop.permute.xlu0 %177
    %vm180 = vcmask 261120
    %v182 = vsel %vm180, %v152, 0
    %v185 = vsel %vm180, %v153, 0
    %v188 = vsel %vm180, %v154, 0
    %v191 = vsel %vm180, %v155, 0
    %193 = vmatpush.msra.mxu0 0.0
    %194 = vmatpush.msra.mxu0 0.0
    %195 = vmatpush.msra.mxu0 0.0
    %196 = vmatpush.msra.mxu0 0.0
    %197 = vmatpush.msra.mxu0 0.0
    %198 = vmatpush.msra.mxu0 0.0
    %199 = vmatpush.msra.mxu0 0.0
    %200 = vmatpush.msra.mxu0 0.0
    %201 = vmatpush.msra.mxu0 0.0
    %202 = vmatpush.msra.mxu0 0.0
    %203 = vmatpush.msra.mxu0 0.0
    %204 = vmatpush.msra.mxu0 0.0
    %205 = vmatpush.msra.mxu0 %v151
    %206 = vmatpush.msra.mxu0 %v150
    %207 = vmatpush.msra.mxu0 %v149
    %208 = vmatpush.msra.mxu0 %v148
    %209 = vmatmul.f32.gmra.mxu0 %v182
    %v210 = vpop.f32.mrf.mxu0
    %v211 = vadd.f32 %v163, %v210
    %212 = vmatmul.f32.gmra.mxu0 %v185
    %v213 = vpop.f32.mrf.mxu0
    %v214 = vadd.f32 %v168, %v213
    %215 = vmatmul.f32.gmra.mxu0 %v188
    %v216 = vpop.f32.mrf.mxu0
    %v217 = vadd.f32 %v173, %v216
    %218 = vmatmul.f32.gmra.mxu0 %v191
    %v219 = vpop.f32.mrf.mxu0
    %v220 = vadd.f32 %v178, %v219
    %221 = vdwg.mxu0
    %v222 = vmax.f32 %v211, 0.0
    %v223 = vmax.f32 %v214, 0.0
    %v224 = vmax.f32 %v217, 0.0
    %v225 = vmax.f32 %v220, 0.0
    %v226 = vld [vmem:[%s8] sm:$0xff]
    %v227 = vld [vmem:[%s8 + $0x8] sm:$0xff]
    %v228 = vld [vmem:[%s8 + $0x10] sm:$0xff]
    %v229 = vld [vmem:[%s8 + $0x18] sm:$0xff]
    %v230 = vadd.s32 %v226, 2147483648
    %vm232 = vcmp.lt.s32.totalorder %v230, 0
    %v233 = vadd.s32 %v227, 2147483648
    %vm235 = vcmp.lt.s32.totalorder %v233, 0
    %v236 = vadd.s32 %v228, 2147483648
    %vm238 = vcmp.lt.s32.totalorder %v236, 0
    %v239 = vadd.s32 %v229, 2147483648
    %vm241 = vcmp.lt.s32.totalorder %v239, 0
    %v242 = vsel %vm232, 1, 0
    %v243 = vsel %vm235, 1, 0
    %v244 = vsel %vm238, 1, 0
    %v245 = vsel %vm241, 1, 0
    %v246 = vcvt.s32.f32 %v242
    %v247 = vcvt.s32.f32 %v243
    %v248 = vcvt.s32.f32 %v244
    %v249 = vcvt.s32.f32 %v245
    %v250 = vmul.f32 %v246, 2.0
    %v251 = vmul.f32 %v247, 2.0
    %v252 = vmul.f32 %v248, 2.0
    %v253 = vmul.f32 %v249, 2.0
    %v254 = vmul.f32 %v222, %v250
    %v255 = vmul.f32 %v223, %v251
    %v256 = vmul.f32 %v224, %v252
    %v257 = vmul.f32 %v225, %v253
    %v258 = vld [vmem:[%s5] sm:$0x3]
    %v259 = vld [vmem:[%s6] sm:$0x3]
    %261 = vset.pattern.permute.xlu0 0
    %262 = vperm.xlu0 %261, %v259
    %v263 = vpop.permute.xlu0 %262
    %v266 = vsel %vm180, %v258, 0
    %268 = vmatpush.msra.mxu0 0.0
    %269 = vmatpush.msra.mxu0 0.0
    %270 = vmatpush.msra.mxu0 0.0
    %271 = vmatpush.msra.mxu0 0.0
    %272 = vmatpush.msra.mxu0 0.0
    %273 = vmatpush.msra.mxu0 0.0
    %274 = vmatpush.msra.mxu0 0.0
    %275 = vmatpush.msra.mxu0 0.0
    %276 = vmatpush.msra.mxu0 0.0
    %277 = vmatpush.msra.mxu0 0.0
    %278 = vmatpush.msra.mxu0 0.0
    %279 = vmatpush.msra.mxu0 0.0
    %280 = vmatpush.msra.mxu0 %v257
    %281 = vmatpush.msra.mxu0 %v256
    %282 = vmatpush.msra.mxu0 %v255
    %283 = vmatpush.msra.mxu0 %v254
    %284 = vmatmul.f32.gmra.mxu0 %v266
    %v285 = vpop.f32.mrf.mxu0
    %v286 = vadd.f32 %v263, %v285
    %287 = vdwg.mxu0
    %288 = vst [vmem:[#allocation2] sm:$0x3] %v286
    // Predicated region
    $region38: #{tpu_custom_call.1} parent=1 // pred_check
      _
    $region39: #{tpu_custom_call.1} parent=1 // pred_check_branch
      %290 = sbr.rel (0) target = $region41
    $region40: #{tpu_custom_call.1} parent=1 // pred_region
      %292 = vsyncadd [#allocation3], 0
      %s294 = sshll.u32 [#allocation2], 4
      %s295 = int_to_ptr.vmem [resolvable:$true] %s294
      %s296 = sshll.u32 %s9, 4
      %s297 = int_to_ptr.hbm [resolvable:$true] %s296
      %299 = dma.vmem_to_hbm [thread:$0]  %s295, 32, %s297, [#allocation3]
    $region41: #{tpu_custom_call.1} parent=1 // pred_fallthru
      _
    // Predicated region
    $region42: #{tpu_custom_call.1} parent=1 // pred_check
      _
    $region43: #{tpu_custom_call.1} parent=1 // pred_check_branch
      %301 = sbr.rel (0) target = $region45
    $region44: #{tpu_custom_call.1} parent=1 // pred_region
      %303 = dma.done [#allocation3], 32
    $region45: #{tpu_custom_call.1} parent=1 // pred_fallthru
      _
    %304 = vsyncpa [#allocation3], 1

</llo_original>
